<compile_context>
chip_gen: v6e
topology: v6e:2x2x1
jax: 0.10.0
libtpu: 0.0.40
codegen_flags: <defaults>
</compile_context>

<pallas_src>
import functools

import jax
import jax.numpy as jnp
import numpy as np
from jax import lax
from jax.experimental import pallas as pl
from jax.experimental.pallas import tpu as pltpu


def _round_up(x, m):
    return ((x + m - 1) // m) * m


def _vmem_budgets():
    """Generation-aware (per-block byte budget, scoped vmem limit)."""
    try:
        vmem_bytes = int(getattr(pltpu.get_tpu_info(), "vmem_capacity_bytes", 0))
    except Exception:
        vmem_bytes = 0
    if vmem_bytes >= 128 * 1024 * 1024:        # v5e / v6e: 128 MiB VMEM
        return 20 * 1024 * 1024, 96 * 1024 * 1024
    # v7x (64 MiB physical VMEM) or unknown: stay conservative.
    return 10 * 1024 * 1024, 40 * 1024 * 1024


def _nll_kernel(preds_ref, tgt_ref, out_ref, *, tile, hw_valid, needs_mask,
                split, blocks_per_split):
    """Per-pixel NLL for one (1, C, tile) logits slab, accumulated lane-wise.

    preds_ref: (1, C, tile) logits in native dtype (class on sublanes, pixels on lanes)
    tgt_ref:   (1, 1, tile) i32 class indices
    out_ref:   (1, 1, tile) f32 per-lane partial NLL sums (resident across j)
    """
    j = pl.program_id(1)

    x = preds_ref[0].astype(jnp.float32)        # (C, tile): upcast in VMEM, not HBM
    t = tgt_ref[0]                              # (1, tile)

    # Dense per-lane log-sum-exp over the class (sublane) axis. The sublane
    # max/sum go to the XLU (free slot); exp is one EUP pass over the slab.
    m = jnp.max(x, axis=0, keepdims=True)                       # (1, tile)
    s = jnp.sum(jnp.exp(x - m), axis=0, keepdims=True)          # (1, tile)
    cls = lax.broadcasted_iota(jnp.int32, x.shape, 0)
    tgt_logit = jnp.sum(jnp.where(cls == t, x, 0.0), axis=0, keepdims=True)

    nll = m + jnp.log(s) - tgt_logit                            # (1, tile)

    if needs_mask:
        # Ragged spatial tail: the last block over-reads past H*W.  Garbage in
        # those lanes only affects those lanes (softmax is per-lane over C);
        # zero them before accumulating.
        if split > 1:
            blk = (pl.program_id(0) % split) * blocks_per_split + j
        else:
            blk = j
        col = blk * tile + lax.broadcasted_iota(jnp.int32, nll.shape, 1)
        nll = jnp.where(col < hw_valid, nll, 0.0)

    @pl.when(j == 0)
    def _():
        out_ref[...] = jnp.zeros_like(out_ref)

    out_ref[...] = out_ref[...] + nll.reshape(1, 1, tile)


def focal_loss(preds, tgts, *, max_tile=32768):
    """preds: (N, C, H, W) float logits; tgts: (N, H, W) int class indices."""
    N, C, H, W = preds.shape
    HW = H * W

    # Contiguous reshapes only: no transpose, no dtype-conversion HBM pass.
    x = preds.reshape(N, C, HW)
    t = tgts.reshape(N, 1, HW).astype(jnp.int32)

    vmem_block_budget, vmem_limit = _vmem_budgets()

    elem_bytes = jnp.dtype(preds.dtype).itemsize
    pack = 8 * max(1, 4 // elem_bytes)            # sublane packing for this dtype
    c_pad = _round_up(C, pack)
    tile_cap = max(128, (vmem_block_budget // (2 * c_pad * elem_bytes)) // 128 * 128)
    tile = min(_round_up(HW, 128), max_tile, tile_cap)

    n_blocks = pl.cdiv(HW, tile)
    needs_mask = (HW % tile) != 0

    # Megacore balance (v7x has 2 TCs): with an odd / single sample count,
    # split the spatial blocks into two independent halves, each with its own
    # accumulator row; harmless on single-TC chips.
    split = 2 if (N % 2 == 1 and n_blocks >= 2 and n_blocks % 2 == 0) else 1
    blocks_per_split = n_blocks // split

    if split > 1:
        in_map = lambda n, j: (n // split, 0, (n % split) * blocks_per_split + j)
    else:
        in_map = lambda n, j: (n, 0, j)
    out_map = lambda n, j: (n, 0, 0)

    grid = (N * split, blocks_per_split)

    cost = pl.CostEstimate(
        flops=int(7 * N * C * HW),
        transcendentals=int(N * (C + 1) * HW),
        bytes_accessed=int(N * (C * HW * elem_bytes + 4 * HW) + 4 * N * split * tile),
    )

    partial_sums = pl.pallas_call(
        functools.partial(
            _nll_kernel, tile=tile, hw_valid=HW, needs_mask=needs_mask,
            split=split, blocks_per_split=blocks_per_split,
        ),
        out_shape=jax.ShapeDtypeStruct((N * split, 1, tile), jnp.float32),
        grid_spec=pltpu.PrefetchScalarGridSpec(
            num_scalar_prefetch=0,
            grid=grid,
            in_specs=[
                # NOTE: pipeline_mode=pl.Buffered(3) on the logits spec is a
                # cheap sweep candidate for tiny-C blocks; default (2) kept.
                pl.BlockSpec((1, C, tile), in_map),
                pl.BlockSpec((1, 1, tile), in_map),
            ],
            out_specs=pl.BlockSpec((1, 1, tile), out_map),
        ),
        compiler_params=pltpu.CompilerParams(
            # Leading axis (samples x spatial-halves) is independent and
            # megacore-shardable; the spatial axis accumulates into the
            # resident output block.
            dimension_semantics=("parallel", "arbitrary"),
            vmem_limit_bytes=vmem_limit,
        ),
        cost_estimate=cost,
    )(x, t)

    # Tiny finalize (scalar): mean over all valid pixels + focal transform.
    # TODO(synk): torch CrossEntropyLoss's ignore_index=-100 / out-of-range
    # class erroring is not modeled; targets are assumed to be valid indices.
    ce = jnp.sum(partial_sums) / jnp.float32(N * HW)
    return 0.8 * (1.0 - jnp.exp(-ce)) ** 2 * ce


def _reference_focal_loss(preds, tgts):
    """Pure-JAX reference matching torch.nn.CrossEntropyLoss + focal transform."""
    N, C, H, W = preds.shape
    logp = jax.nn.log_softmax(
        jnp.transpose(preds, (0, 2, 3, 1)).reshape(-1, C).astype(jnp.float32),
        axis=-1,
    )
    t = tgts.reshape(-1).astype(jnp.int32)
    nll = -jnp.take_along_axis(logp, t[:, None], axis=-1)[:, 0]
    ce = jnp.mean(nll)
    return 0.8 * (1.0 - jnp.exp(-ce)) ** 2 * ce


if __name__ == "__main__":
    key = jax.random.PRNGKey(0)
    k_preds, k_tgts = jax.random.split(key)

    N, C, H, W = 2, 4, 16, 16
    preds = jax.random.normal(k_preds, (N, C, H, W), dtype=jnp.float32)
    tgts = jax.random.randint(k_tgts, (N, H, W), 0, C, dtype=jnp.int32)

    out = jax.block_until_ready(focal_loss(preds, tgts))
    ref = jax.block_until_ready(_reference_focal_loss(preds, tgts))
    np.testing.assert_allclose(np.asarray(out), np.asarray(ref), rtol=2e-4, atol=1e-6)

    print("KERNEL_OK")
</pallas_src>

<mosaic_0001>
module attributes {stable_mosaic.version = 11 : i64} {
  func.func @_nll_kernel(%arg0: i32, %arg1: i32, %arg2: memref<1x4x256xf32, #tpu.memory_space<vmem>>, %arg3: memref<1x1x256xi32, #tpu.memory_space<vmem>>, %arg4: memref<1x1x256xf32, #tpu.memory_space<vmem>>) attributes {dimension_semantics = [#tpu.dimension_semantics<parallel>, #tpu.dimension_semantics<arbitrary>], iteration_bounds = array<i64: 2, 1>, scalar_prefetch = 0 : i64, scratch_operands = 0 : i64, tpu.core_type = #tpu.core_type<tc>, window_params = [{transform_indices = @transform_0, window_bounds = array<i64: 1, 4, 256>}, {transform_indices = @transform_1, window_bounds = array<i64: 1, 1, 256>}, {transform_indices = @transform_2, window_bounds = array<i64: 1, 1, 256>}]} {
    %c0 = arith.constant 0 : index
    %c0_0 = arith.constant 0 : index
    %c0_1 = arith.constant 0 : index
    %0 = vector.load %arg2[%c0, %c0_0, %c0_1] : memref<1x4x256xf32, #tpu.memory_space<vmem>>, vector<1x4x256xf32>
    %1 = vector.shape_cast %0 : vector<1x4x256xf32> to vector<4x256xf32>
    %c0_2 = arith.constant 0 : index
    %c0_3 = arith.constant 0 : index
    %c0_4 = arith.constant 0 : index
    %2 = vector.load %arg3[%c0_2, %c0_3, %c0_4] : memref<1x1x256xi32, #tpu.memory_space<vmem>>, vector<1x1x256xi32>
    %3 = vector.shape_cast %2 : vector<1x1x256xi32> to vector<1x256xi32>
    %cst = arith.constant dense<0xFF800000> : vector<256xf32>
    %4 = vector.multi_reduction <maximumf>, %1, %cst [0] : vector<4x256xf32> to vector<256xf32>
    %5 = vector.shape_cast %4 : vector<256xf32> to vector<1x256xf32>
    %6 = vector.broadcast %5 : vector<1x256xf32> to vector<4x256xf32>
    %7 = arith.subf %1, %6 : vector<4x256xf32>
    %8 = math.exp %7 : vector<4x256xf32>
    %cst_5 = arith.constant dense<0.000000e+00> : vector<256xf32>
    %9 = vector.multi_reduction <add>, %8, %cst_5 [0] : vector<4x256xf32> to vector<256xf32>
    %10 = vector.shape_cast %9 : vector<256xf32> to vector<1x256xf32>
    %11 = tpu.iota {dimensions = array<i32: 0>} : vector<4x256xi32>
    %12 = vector.broadcast %3 : vector<1x256xi32> to vector<4x256xi32>
    %13 = arith.cmpi eq, %11, %12 : vector<4x256xi32>
    %cst_6 = arith.constant 0.000000e+00 : f32
    %14 = vector.broadcast %cst_6 : f32 to vector<4x256xf32>
    %15 = arith.select %13, %1, %14 : vector<4x256xi1>, vector<4x256xf32>
    %cst_7 = arith.constant dense<0.000000e+00> : vector<256xf32>
    %16 = vector.multi_reduction <add>, %15, %cst_7 [0] : vector<4x256xf32> to vector<256xf32>
    %17 = vector.shape_cast %16 : vector<256xf32> to vector<1x256xf32>
    %18 = math.log %10 : vector<1x256xf32>
    %19 = arith.addf %5, %18 : vector<1x256xf32>
    %20 = arith.subf %19, %17 : vector<1x256xf32>
    %c0_i32 = arith.constant 0 : i32
    %21 = arith.cmpi eq, %arg1, %c0_i32 : i32
    %22 = arith.extui %21 : i1 to i32
    %c0_i32_8 = arith.constant 0 : i32
    %23 = arith.cmpi ne, %22, %c0_i32_8 : i32
    scf.if %23 {
      %cst_15 = arith.constant 0.000000e+00 : f32
      %28 = vector.broadcast %cst_15 : f32 to vector<1x1x256xf32>
      %c0_16 = arith.constant 0 : index
      %c0_17 = arith.constant 0 : index
      %c0_18 = arith.constant 0 : index
      %29 = vector.load %arg4[%c0_16, %c0_17, %c0_18] : memref<1x1x256xf32, #tpu.memory_space<vmem>>, vector<1x1x256xf32>
      tpu.vector_store %arg4[%c0_16, %c0_17, %c0_18], %28 {strides = array<i32>} : memref<1x1x256xf32, #tpu.memory_space<vmem>>, vector<1x1x256xf32>,
    } else {
    }
    %c0_9 = arith.constant 0 : index
    %c0_10 = arith.constant 0 : index
    %c0_11 = arith.constant 0 : index
    %24 = vector.load %arg4[%c0_9, %c0_10, %c0_11] : memref<1x1x256xf32, #tpu.memory_space<vmem>>, vector<1x1x256xf32>
    %25 = vector.shape_cast %20 : vector<1x256xf32> to vector<1x1x256xf32>
    %26 = arith.addf %24, %25 : vector<1x1x256xf32>
    %c0_12 = arith.constant 0 : index
    %c0_13 = arith.constant 0 : index
    %c0_14 = arith.constant 0 : index
    %27 = vector.load %arg4[%c0_12, %c0_13, %c0_14] : memref<1x1x256xf32, #tpu.memory_space<vmem>>, vector<1x1x256xf32>
    tpu.vector_store %arg4[%c0_12, %c0_13, %c0_14], %26 {strides = array<i32>} : memref<1x1x256xf32, #tpu.memory_space<vmem>>, vector<1x1x256xf32>,
    return
  }
  func.func @transform_0(%arg0: i32, %arg1: i32) -> (i32, i32, i32) {
    %c0_i32 = arith.constant 0 : i32
    %c0_i32_0 = arith.constant 0 : i32
    return %arg0, %c0_i32, %arg1 : i32, i32, i32
  }
  func.func @transform_1(%arg0: i32, %arg1: i32) -> (i32, i32, i32) {
    %c0_i32 = arith.constant 0 : i32
    %c0_i32_0 = arith.constant 0 : i32
    return %arg0, %c0_i32, %arg1 : i32, i32, i32
  }
  func.func @transform_2(%arg0: i32, %arg1: i32) -> (i32, i32, i32) {
    %c0_i32 = arith.constant 0 : i32
    %c0_i32_0 = arith.constant 0 : i32
    %c0_i32_1 = arith.constant 0 : i32
    return %arg0, %c0_i32, %c0_i32_0 : i32, i32, i32
  }
}

</mosaic_0001>

<llo_original>
// kernel: tpu_custom_call.1
$region0: #{tpu_custom_call.1}
  #allocation0 [shape = 'u32[]', space=smem, size = 0x4, offset = 0x4, fixed_abs, tag = 'smem constant byte address 0x4 - core index']
  #allocation1 [shape = 'u32[144,128]{1,0:T(1,128)}', space=vmem, size = 0x12000, scoped, tag = 'internal scratch']
  %s0 = inlined_call_operand.hbm [shape: f32[2,4,256], index: 0, kind: input, shape index: {}]
  %s1 = inlined_call_operand.hbm [shape: s32[2,1,256], index: 1, kind: input, shape index: {}]
  %s2 = inlined_call_operand.hbm [shape: f32[2,1,256], index: 2, kind: output, shape index: {}]
  %s3 = sld [smem:[#allocation0]]
  $region53: #{tpu_custom_call.1} parent=0
    _
  %s5 = ssub.s32 1, %s3
  %s6 = scalar_select 0, %s5, %s3
  $region1: #{tpu_custom_call.1} parent=0
    #allocation2 [shape = 'u8[8192]{0}', space=vmem, size = 0x2000, scoped, tag = 'input window, operand 0']
    #allocation3 [shape = 's32[2]{0}', space=sflag, size = 0x8, scoped, tag = 'scoped memory for tpu_custom_call.1']
    #allocation4 [shape = 's32[2]{0}', space=sflag, size = 0x8, scoped, tag = 'scoped memory for tpu_custom_call.1']
    #allocation5 [shape = 'u8[2048]{0}', space=vmem, size = 0x800, scoped, tag = 'input window, operand 1']
    #allocation6 [shape = 's32[2]{0}', space=sflag, size = 0x8, scoped, tag = 'scoped memory for tpu_custom_call.1']
    #allocation7 [shape = 'u8[2048]{0}', space=vmem, size = 0x800, scoped, tag = 'output window, operand 0']
    %7 = vsyncpa [#allocation3], 0
    %s8 = scalar_lea.sflag [#allocation3], 1
    %9 = vsyncpa %s8, 0
    %10 = vsyncpa [#allocation6], 0
    %s11 = scalar_lea.sflag [#allocation6], 1
    %12 = vsyncpa %s11, 0
    %13 = vsyncpa [#allocation4], 0
    %s14 = scalar_lea.sflag [#allocation4], 1
    %15 = vsyncpa %s14, 0
    loop: start=0, step=1, limit=4
    $region2: #{tpu_custom_call.1} parent=1 // loop_pre_header
      _
    $region3: #{tpu_custom_call.1} parent=1 // loop_header
      %s17 = sphi 0, %s21
      %p18 = scmp.ge.s32.totalorder %s17, 4
      %s24 = sphi 0, %s36
      %s25 = sphi 0, %s32
      %s26 = sphi 0, %s24
      %s27 = sphi 0, %s25
      %s28 = sphi 0, %s26
      %s29 = sphi 0, %s27
      %s41 = sphi 0, %s43
      %s44 = sphi 0, %s41
      %s45 = sphi 0, %s44
      %s61 = sphi 0, %s45
      %s69 = sphi 0, %s71
      %s72 = sphi 0, %s69
      %s73 = sphi 0, %s72
      %s89 = sphi 0, %s73
      %s95 = sphi 0, %s97
      %s98 = sphi 0, %s95
      %s99 = sphi 0, %s98
      %s115 = sphi 0, %s99
    $region4: #{tpu_custom_call.1} parent=1 // loop_header_branch
      %20 = sbr.rel (%p18) target = $region8
    $region5: #{tpu_custom_call.1} parent=1 // loop_body
      %s22 = ssub.s32 %s17, 1
      %s23 = ssub.s32 %s17, 2
      %s30 = sadd.s32 1, %s25
      %p31 = scmp.ge.s32.totalorder %s30, 1
      %s32 = scalar_select %p31, 0, %s30
      %s33 = sadd.s32 1, %s24
      %s34 = scalar_select %p31, %s33, %s24
      %p35 = scmp.ge.s32.totalorder %s34, 2
      %s36 = scalar_select %p35, 0, %s34
      %s37 = ssub.s32 %s24, %s36
      %s38 = ssub.s32 %s25, %s32
      %s39 = sor.u32 %s37, %s38
      %p40 = scmp.eq.s32.totalorder %s39, 0
      %s42 = sadd.s32 %s41, 1
      %s43 = scalar_select %p40, %s41, %s42
      %p46 = pneg %p40
      %p47 = scmp.eq.s32.totalorder %s17, 1
      %p48 = por %p46, %p47
      %p49 = scmp.ne.s32.totalorder %s41, %s44
      %p50 = scmp.eq.s32.totalorder %s17, 0
      %p51 = por %p49, %p50
      %p52 = scmp.ne.s32.totalorder %s41, %s44
      %p53 = scmp.eq.s32.totalorder %s22, 1
      %p54 = por %p52, %p53
      %p55 = scmp.ne.s32.totalorder %s44, %s45
      %p56 = scmp.eq.s32.totalorder %s22, 0
      %p57 = por %p55, %p56
      %p58 = scmp.ne.s32.totalorder %s44, %s45
      %p59 = scmp.eq.s32.totalorder %s23, 1
      %p60 = por %p58, %p59
      %p62 = scmp.ne.s32.totalorder %s45, %s61
      %p63 = scmp.eq.s32.totalorder %s23, 0
      %p64 = por %p62, %p63
      %s65 = ssub.s32 %s24, %s36
      %s66 = ssub.s32 %s25, %s32
      %s67 = sor.u32 %s65, %s66
      %p68 = scmp.eq.s32.totalorder %s67, 0
      %s70 = sadd.s32 %s69, 1
      %s71 = scalar_select %p68, %s69, %s70
      %p74 = pneg %p68
      %p75 = scmp.eq.s32.totalorder %s17, 1
      %p76 = por %p74, %p75
      %p77 = scmp.ne.s32.totalorder %s69, %s72
      %p78 = scmp.eq.s32.totalorder %s17, 0
      %p79 = por %p77, %p78
      %p80 = scmp.ne.s32.totalorder %s69, %s72
      %p81 = scmp.eq.s32.totalorder %s22, 1
      %p82 = por %p80, %p81
      %p83 = scmp.ne.s32.totalorder %s72, %s73
      %p84 = scmp.eq.s32.totalorder %s22, 0
      %p85 = por %p83, %p84
      %p86 = scmp.ne.s32.totalorder %s72, %s73
      %p87 = scmp.eq.s32.totalorder %s23, 1
      %p88 = por %p86, %p87
      %p90 = scmp.ne.s32.totalorder %s73, %s89
      %p91 = scmp.eq.s32.totalorder %s23, 0
      %p92 = por %p90, %p91
      %s93 = ssub.s32 %s24, %s36
      %p94 = scmp.eq.s32.totalorder %s93, 0
      %s96 = sadd.s32 %s95, 1
      %s97 = scalar_select %p94, %s95, %s96
      %p100 = pneg %p94
      %p101 = scmp.eq.s32.totalorder %s17, 1
      %p102 = por %p100, %p101
      %p103 = scmp.ne.s32.totalorder %s95, %s98
      %p104 = scmp.eq.s32.totalorder %s17, 0
      %p105 = por %p103, %p104
      %p106 = scmp.ne.s32.totalorder %s95, %s98
      %p107 = scmp.eq.s32.totalorder %s22, 1
      %p108 = por %p106, %p107
      %p109 = scmp.ne.s32.totalorder %s98, %s99
      %p110 = scmp.eq.s32.totalorder %s22, 0
      %p111 = por %p109, %p110
      %p112 = scmp.ne.s32.totalorder %s98, %s99
      %p113 = scmp.eq.s32.totalorder %s23, 1
      %p114 = por %p112, %p113
      %p116 = scmp.ne.s32.totalorder %s99, %s115
      %p117 = scmp.eq.s32.totalorder %s23, 0
      %p118 = por %p116, %p117
      %p119 = scmp.le.s32.totalorder 1, %s17
      %p120 = scmp.lt.s32.totalorder %s17, 3
      %p121 = pnand %p119, %p120
      %p122 = pneg %p121
      // Predicated region
      $region9: #{tpu_custom_call.1} parent=5 // pred_check
        _
      $region10: #{tpu_custom_call.1} parent=5 // pred_check_branch
        %124 = sbr.rel (%p121) target = $region12
      $region11: #{tpu_custom_call.1} parent=5 // pred_region
        %s125 = ssub.s32 %s17, 1
      $region12: #{tpu_custom_call.1} parent=5 // pred_fallthru
        _
      %p126 = scmp.lt.s32.totalorder %s17, 2
      // Predicated region
      $region13: #{tpu_custom_call.1} parent=5 // pred_check
        %p127 = pneg %p126
      $region14: #{tpu_custom_call.1} parent=5 // pred_check_branch
        %129 = sbr.rel (%p127) target = $region16
      $region15: #{tpu_custom_call.1} parent=5 // pred_region
        // Predicated region
        $region17: #{tpu_custom_call.1} parent=15 // pred_check
          %p130 = pneg %p51
        $region18: #{tpu_custom_call.1} parent=15 // pred_check_branch
          %132 = sbr.rel (%p130) target = $region20
        $region19: #{tpu_custom_call.1} parent=15 // pred_region
          %s133 = sand.u32 %s41, 1
          %s134 = scalar_lea.sflag [#allocation3], %s133
          %s135 = sand.u32 %s41, 1
          %s136 = smul.addr %s135, 8
          %s137 = scalar_lea.vmem [#allocation2], %s136
          %s138 = smul.u32 2, %s25
          %s140 = ssub.s32 128, 128
          %141 = vsyncadd %s134, %s140
          %s142 = smul.addr %s24, 2
          %s143 = sadd.s32 %s138, %s142
          %s144 = smul.addr %s143, 64
          %s145 = scalar_lea.hbm %s0, %s144
          %s147 = sshll.u32 %s137, 4
          %s148 = int_to_ptr.vmem [resolvable:$true] %s147
          %150 = dma.hbm_to_vmem [thread:$0]  %s145, 128, %s148, %s134
        $region20: #{tpu_custom_call.1} parent=15 // pred_fallthru
          _
        // Predicated region
        $region21: #{tpu_custom_call.1} parent=15 // pred_check
          %p151 = pneg %p79
        $region22: #{tpu_custom_call.1} parent=15 // pred_check_branch
          %153 = sbr.rel (%p151) target = $region24
        $region23: #{tpu_custom_call.1} parent=15 // pred_region
          %s154 = sand.u32 %s69, 1
          %s155 = scalar_lea.sflag [#allocation6], %s154
          %s156 = sand.u32 %s69, 1
          %s157 = smul.addr %s156, 2
          %s158 = scalar_lea.vmem [#allocation5], %s157
          %s159 = smul.u32 2, %s25
          %s161 = ssub.s32 32, 32
          %162 = vsyncadd %s155, %s161
          %s163 = smul.addr %s24, 2
          %s164 = sadd.s32 %s159, %s163
          %s165 = smul.addr %s164, 16
          %s166 = scalar_lea.hbm %s1, %s165
          %s168 = sshll.u32 %s158, 4
          %s169 = int_to_ptr.vmem [resolvable:$true] %s168
          %171 = dma.hbm_to_vmem [thread:$0]  %s166, 32, %s169, %s155
        $region24: #{tpu_custom_call.1} parent=15 // pred_fallthru
          _
      $region16: #{tpu_custom_call.1} parent=5 // pred_fallthru
        _
      %p172 = scmp.le.s32.totalorder 1, %s17
      %p173 = scmp.lt.s32.totalorder %s17, 3
      %p174 = pnand %p172, %p173
      %p175 = pneg %p174
      // Predicated region
      $region25: #{tpu_custom_call.1} parent=5 // pred_check
        _
      $region26: #{tpu_custom_call.1} parent=5 // pred_check_branch
        %177 = sbr.rel (%p174) target = $region28
      $region27: #{tpu_custom_call.1} parent=5 // pred_region
        %s178 = ssub.s32 %s17, 1
        %s179 = sand.u32 %s44, 1
        %s180 = scalar_lea.sflag [#allocation3], %s179
        %s181 = sand.u32 %s44, 1
        %s182 = smul.addr %s181, 8
        %s183 = scalar_lea.vmem [#allocation2], %s182
        // Predicated region
        $region29: #{tpu_custom_call.1} parent=27 // pred_check
          %p184 = pneg %p57
        $region30: #{tpu_custom_call.1} parent=27 // pred_check_branch
          %186 = sbr.rel (%p184) target = $region32
        $region31: #{tpu_custom_call.1} parent=27 // pred_region
          %187 = dma.done %s180, 128
        $region32: #{tpu_custom_call.1} parent=27 // pred_fallthru
          _
        %s188 = sand.u32 %s72, 1
        %s189 = scalar_lea.sflag [#allocation6], %s188
        %s190 = sand.u32 %s72, 1
        %s191 = smul.addr %s190, 2
        %s192 = scalar_lea.vmem [#allocation5], %s191
        // Predicated region
        $region33: #{tpu_custom_call.1} parent=27 // pred_check
          %p193 = pneg %p85
        $region34: #{tpu_custom_call.1} parent=27 // pred_check_branch
          %195 = sbr.rel (%p193) target = $region36
        $region35: #{tpu_custom_call.1} parent=27 // pred_region
          %196 = dma.done %s189, 32
        $region36: #{tpu_custom_call.1} parent=27 // pred_fallthru
          _
        %s197 = sand.u32 %s44, 1
        %s198 = scalar_lea.sflag [#allocation3], %s197
        %s199 = sand.u32 %s44, 1
        %s200 = smul.addr %s199, 8
        %s201 = scalar_lea.vmem [#allocation2], %s200
        %p202 = pneg %p57
        %p203 = pneg %p54
        %s204 = sand.u32 %s72, 1
        %s205 = scalar_lea.sflag [#allocation6], %s204
        %s206 = sand.u32 %s72, 1
        %s207 = smul.addr %s206, 2
        %s208 = scalar_lea.vmem [#allocation5], %s207
        %p209 = pneg %p85
        %p210 = pneg %p82
        %p211 = pneg %p111
        %p212 = pneg %p108
        %s213 = sand.u32 %s98, 1
        %s214 = scalar_lea.sflag [#allocation4], %s213
        %s215 = sand.u32 %s98, 1
        %s216 = smul.addr %s215, 2
        %s217 = scalar_lea.vmem [#allocation7], %s216
        %s218 = smul.u32 2, %s27
        %s219 = smul.u32 2, %s27
        %v220 = vld [vmem:[%s183] sm:$0xff]
        %v221 = vld [vmem:[%s192] sm:$0x3]
        %v223 = vcombine.high %v220, %v220
        %vm225 = vcmask 1043456
        %v226 = vsel %vm225, %v220, -inf
        %v227 = vrot.slane %v226, 4
        %v228 = vmax.f32 %v226, %v227
        %v229 = vrot.slane %v228, 2
        %v230 = vmax.f32 %v228, %v229
        %v231 = vrot.slane %v230, 1
        %v232 = vmax.f32 %v230, %v231
        %v233 = vsel %vm225, %v223, -inf
        %v234 = vrot.slane %v233, 4
        %v235 = vmax.f32 %v233, %v234
        %v236 = vrot.slane %v235, 2
        %v237 = vmax.f32 %v235, %v236
        %v238 = vrot.slane %v237, 1
        %v239 = vmax.f32 %v237, %v238
        %v242 = vcombine.low %v232, %v239
        %v244 = vsub.f32 %v220, %v242
        %v245 = vmul.f32 %v244, 1.442695
        %v246 = vpow.pop %v245
        %v248 = vcombine.high %v246, %v246
        %v250 = vsel %vm225, %v246, 0.0
        %v251 = vrot.slane %v250, 4
        %v252 = vadd.f32 %v250, %v251
        %v253 = vrot.slane %v252, 2
        %v254 = vadd.f32 %v252, %v253
        %v255 = vrot.slane %v254, 1
        %v256 = vadd.f32 %v254, %v255
        %v257 = vsel %vm225, %v248, 0.0
        %v258 = vrot.slane %v257, 4
        %v259 = vadd.f32 %v257, %v258
        %v260 = vrot.slane %v259, 2
        %v261 = vadd.f32 %v259, %v260
        %v262 = vrot.slane %v261, 1
        %v263 = vadd.f32 %v261, %v262
        %v264 = vlaneseq
        %v265 = vshrl.u32 %v264, 7
        %v266 = vlaneseq
        %v267 = vshrl.u32 %v266, 7
        %v268 = vsub.s32 0, %v267
        %v269 = vrot.slane %v221, %v268
        %v270 = vlaneseq
        %v271 = vshrl.u32 %v270, 7
        %v272 = vsub.s32 1, %v271
        %v273 = vrot.slane %v221, %v272
        %vm274 = vcmp.eq.s32.totalorder %v265, %v269
        %vm275 = vcmp.eq.s32.totalorder %v265, %v273
        %v276 = vsel %vm274, %v220, 0.0
        %v277 = vsel %vm275, %v223, 0.0
        %v278 = vsel %vm225, %v276, 0.0
        %v279 = vrot.slane %v278, 4
        %v280 = vadd.f32 %v278, %v279
        %v281 = vrot.slane %v280, 2
        %v282 = vadd.f32 %v280, %v281
        %v283 = vrot.slane %v282, 1
        %v284 = vadd.f32 %v282, %v283
        %v285 = vsel %vm225, %v277, 0.0
        %v286 = vrot.slane %v285, 4
        %v287 = vadd.f32 %v285, %v286
        %v288 = vrot.slane %v287, 2
        %v289 = vadd.f32 %v287, %v288
        %v290 = vrot.slane %v289, 1
        %v291 = vadd.f32 %v289, %v290
        %v292 = vlog2.pop %v256
        %v293 = vmul.f32 %v292, 0.6931472
        %v294 = vlog2.pop %v263
        %v295 = vmul.f32 %v294, 0.6931472
        %v296 = vadd.f32 %v232, %v293
        %v297 = vadd.f32 %v239, %v295
        %v298 = vsub.f32 %v296, %v284
        %v299 = vsub.f32 %v297, %v291
        %p300 = scmp.eq.s32.totalorder %s27, 0
        // Predicated region
        $region37: #{tpu_custom_call.1} parent=27 // pred_check
          %p301 = pneg %p300
        $region38: #{tpu_custom_call.1} parent=27 // pred_check_branch
          %303 = sbr.rel (%p301) target = $region40
        $region39: #{tpu_custom_call.1} parent=27 // pred_region
          %v304 = vlaneseq
          %vm305 = vcmp.ge.s32.totalorder %v304, 0
          %vm306 = vcmp.lt.s32.totalorder %v304, 256
          %vm307 = vmand %vm305, %vm306
          %308 = vst.msk [vmem:[%s217] sm:$0x3] %vm307, 0.0
        $region40: #{tpu_custom_call.1} parent=27 // pred_fallthru
          _
        %v309 = vld [vmem:[%s217] sm:$0x3]
        %v312 = vcombine.low %v298, %v299
        %v314 = vunpack.c.l.s4 1966171168
        %v315 = vunpack.c.0.s8 %v314
        %v316 = vlaneseq
        %v317 = vshrl.u32 %v316, 7
        %v318 = vsub.s32 %v315, %v317
        %v319 = vrot.slane %v312, %v318
        %v321 = vunpack.c.l.s4 1966171168
        %v322 = vunpack.c.0.s8 %v321
        %v323 = vlaneseq
        %v324 = vshrl.u32 %v323, 7
        %v325 = vsub.s32 %v322, %v324
        %v326 = vrot.slane %v319, %v325
        %v328 = vadd.f32 %v309, %v326
        %v329 = vlaneseq
        %vm330 = vcmp.ge.s32.totalorder %v329, 0
        %vm331 = vcmp.lt.s32.totalorder %v329, 256
        %vm332 = vmand %vm330, %vm331
        %333 = vst.msk [vmem:[%s217] sm:$0x3] %vm332, %v328
        %s334 = sand.u32 %s98, 1
        %s335 = scalar_lea.sflag [#allocation4], %s334
        %s336 = sand.u32 %s98, 1
        %s337 = smul.addr %s336, 2
        %s338 = scalar_lea.vmem [#allocation7], %s337
        // Predicated region
        $region41: #{tpu_custom_call.1} parent=27 // pred_check
          %p339 = pneg %p108
        $region42: #{tpu_custom_call.1} parent=27 // pred_check_branch
          %341 = sbr.rel (%p339) target = $region44
        $region43: #{tpu_custom_call.1} parent=27 // pred_region
          %s343 = ssub.s32 32, 32
          %344 = vsyncadd %s335, %s343
          %s345 = smul.addr %s26, 2
          %s346 = smul.addr %s345, 16
          %s347 = scalar_lea.hbm %s2, %s346
          %s349 = sshll.u32 %s338, 4
          %s350 = int_to_ptr.vmem [resolvable:$true] %s349
          %352 = dma.vmem_to_hbm [thread:$0]  %s350, 32, %s347, %s335
        $region44: #{tpu_custom_call.1} parent=27 // pred_fallthru
          _
      $region28: #{tpu_custom_call.1} parent=5 // pred_fallthru
        _
      %p353 = scmp.le.s32.totalorder 2, %s17
      // Predicated region
      $region45: #{tpu_custom_call.1} parent=5 // pred_check
        %p354 = pneg %p353
      $region46: #{tpu_custom_call.1} parent=5 // pred_check_branch
        %356 = sbr.rel (%p354) target = $region48
      $region47: #{tpu_custom_call.1} parent=5 // pred_region
        %s357 = ssub.s32 %s17, 2
        // Predicated region
        $region49: #{tpu_custom_call.1} parent=47 // pred_check
          %p358 = pneg %p114
        $region50: #{tpu_custom_call.1} parent=47 // pred_check_branch
          %360 = sbr.rel (%p358) target = $region52
        $region51: #{tpu_custom_call.1} parent=47 // pred_region
          %s361 = sand.u32 %s99, 1
          %s362 = scalar_lea.sflag [#allocation4], %s361
          %s363 = sand.u32 %s99, 1
          %s364 = smul.addr %s363, 2
          %s365 = scalar_lea.vmem [#allocation7], %s364
          %366 = dma.done %s362, 32
        $region52: #{tpu_custom_call.1} parent=47 // pred_fallthru
          _
      $region48: #{tpu_custom_call.1} parent=5 // pred_fallthru
        _
    $region6: #{tpu_custom_call.1} parent=1 // loop_footer
      %s21 = sadd.s32 1, %s17
    $region7: #{tpu_custom_call.1} parent=1 // loop_footer_branch
      %16 = sbr.rel target = $region3
    $region8: #{tpu_custom_call.1} parent=1 // loop_exit
      _
    %367 = vsyncpa [#allocation3], 1
    %s368 = scalar_lea.sflag [#allocation3], 1
    %369 = vsyncpa %s368, 1
    %370 = vsyncpa [#allocation6], 1
    %s371 = scalar_lea.sflag [#allocation6], 1
    %372 = vsyncpa %s371, 1
    %373 = vsyncpa [#allocation4], 1
    %s374 = scalar_lea.sflag [#allocation4], 1
    %375 = vsyncpa %s374, 1

</llo_original>
